<compile_context>
chip_gen: v7x
topology: tpu7x:2x2x1
jax: 0.10.0
libtpu: 0.0.40
codegen_flags: <defaults>
</compile_context>

<pallas_src>
import functools

import jax
import jax.numpy as jnp
import numpy as np
from jax.experimental import pallas as pl
from jax.experimental.pallas import tpu as pltpu

BN_EPS = 1e-5
NEG_SLOPE = 0.2                 # LeakyReLU(negative_slope=0.2)
PRED_LANES = 128                # Cout=1 pred output padded to a full lane tile
VMEM_LIMIT_BYTES = 32 * 1024 * 1024


def _round_up(x, m):
    return (x + m - 1) // m * m


def _pad2d(x, rows, cols):
    r, c = x.shape
    if r == rows and c == cols:
        return x
    return jnp.pad(x, ((0, rows - r), (0, cols - c)))


def _compiler_params():
    return pltpu.CompilerParams(
        dimension_semantics=("parallel", "arbitrary"),
        vmem_limit_bytes=VMEM_LIMIT_BYTES)


# ----------------------------------------------------------------------------
# Pallas kernels
# ----------------------------------------------------------------------------
def _conv_bn_lrelu_kernel(p_ref, w_ref, b_ref, o_ref, acc_ref):
    """K-tiled im2col matmul -> folded-BN bias -> LeakyReLU."""
    k = pl.program_id(1)

    @pl.when(k == 0)
    def _init():
        acc_ref[...] = jnp.zeros_like(acc_ref)

    acc_ref[...] += jnp.dot(p_ref[...], w_ref[...],
                            preferred_element_type=jnp.float32)

    @pl.when(k == pl.num_programs(1) - 1)
    def _epilogue():
        y = acc_ref[...] + b_ref[...]
        y = jnp.where(y >= 0.0, y, NEG_SLOPE * y)
        o_ref[...] = y.astype(o_ref.dtype)


def _conv_bn_lrelu_pred_kernel(p_ref, w_ref, b_ref, wp_ref, bp_ref,
                               sig_ref, logit_ref, acc_ref):
    """Last encoder conv with the 1x1 pred conv + BN + sigmoid fused in."""
    k = pl.program_id(1)

    @pl.when(k == 0)
    def _init():
        acc_ref[...] = jnp.zeros_like(acc_ref)

    acc_ref[...] += jnp.dot(p_ref[...], w_ref[...],
                            preferred_element_type=jnp.float32)

    @pl.when(k == pl.num_programs(1) - 1)
    def _epilogue():
        y = acc_ref[...] + b_ref[...]                       # (TM, C_last) f32
        y = jnp.where(y >= 0.0, y, NEG_SLOPE * y)
        # pred: 1x1 conv + folded BN, output padded to 128 lanes (lane-dense).
        logit = jnp.dot(y.astype(jnp.bfloat16), wp_ref[...],
                        preferred_element_type=jnp.float32) + bp_ref[...]
        logit_ref[...] = logit
        sig_ref[...] = jax.nn.sigmoid(logit)


# ----------------------------------------------------------------------------
# pallas_call wrappers (tiled M x K grid, bf16 operands, f32 accumulation)
# ----------------------------------------------------------------------------
def fused_conv_layer(patches, w_mat, bias, *, tm_max=512, tk_max=512):
    m, k_dim = patches.shape
    c_out = w_mat.shape[1]
    tm = min(tm_max, _round_up(m, 8))
    tk = min(tk_max, _round_up(k_dim, 128))
    m_pad = _round_up(m, tm)
    k_pad = _round_up(k_dim, tk)

    p = _pad2d(patches, m_pad, k_pad).astype(jnp.bfloat16)
    w = _pad2d(w_mat, k_pad, c_out).astype(jnp.bfloat16)
    b = bias.reshape(1, c_out).astype(jnp.float32)

    out = pl.pallas_call(
        _conv_bn_lrelu_kernel,
        out_shape=jax.ShapeDtypeStruct((m_pad, c_out), jnp.bfloat16),
        grid=(m_pad // tm, k_pad // tk),
        in_specs=[
            pl.BlockSpec((tm, tk), lambda i, k: (i, k)),
            pl.BlockSpec((tk, c_out), lambda i, k: (k, 0)),
            pl.BlockSpec((1, c_out), lambda i, k: (0, 0)),
        ],
        out_specs=pl.BlockSpec((tm, c_out), lambda i, k: (i, 0)),
        scratch_shapes=[pltpu.VMEM((tm, c_out), jnp.float32)],
        compiler_params=_compiler_params(),
    )(p, w, b)
    return out[:m]


def fused_conv_pred_layer(patches, w_mat, bias, w_pred, b_pred,
                          *, tm_max=512, tk_max=512):
    m, k_dim = patches.shape
    c_out = w_mat.shape[1]
    tm = min(tm_max, _round_up(m, 8))
    tk = min(tk_max, _round_up(k_dim, 128))
    m_pad = _round_up(m, tm)
    k_pad = _round_up(k_dim, tk)

    p = _pad2d(patches, m_pad, k_pad).astype(jnp.bfloat16)
    w = _pad2d(w_mat, k_pad, c_out).astype(jnp.bfloat16)
    b = bias.reshape(1, c_out).astype(jnp.float32)
    wp = _pad2d(w_pred, c_out, PRED_LANES).astype(jnp.bfloat16)       # (C, 128)
    bp = _pad2d(b_pred.reshape(1, -1), 1, PRED_LANES).astype(jnp.float32)

    sig, logit = pl.pallas_call(
        _conv_bn_lrelu_pred_kernel,
        out_shape=(jax.ShapeDtypeStruct((m_pad, PRED_LANES), jnp.float32),
                   jax.ShapeDtypeStruct((m_pad, PRED_LANES), jnp.float32)),
        grid=(m_pad // tm, k_pad // tk),
        in_specs=[
            pl.BlockSpec((tm, tk), lambda i, k: (i, k)),
            pl.BlockSpec((tk, c_out), lambda i, k: (k, 0)),
            pl.BlockSpec((1, c_out), lambda i, k: (0, 0)),
            pl.BlockSpec((c_out, PRED_LANES), lambda i, k: (0, 0)),
            pl.BlockSpec((1, PRED_LANES), lambda i, k: (0, 0)),
        ],
        out_specs=(pl.BlockSpec((tm, PRED_LANES), lambda i, k: (i, 0)),
                   pl.BlockSpec((tm, PRED_LANES), lambda i, k: (i, 0))),
        scratch_shapes=[pltpu.VMEM((tm, c_out), jnp.float32)],
        compiler_params=_compiler_params(),
    )(p, w, b, wp, bp)
    return sig[:m, :1], logit[:m, :1]


# ----------------------------------------------------------------------------
# Glue (layout plumbing / parameter folding in plain JAX)
# ----------------------------------------------------------------------------
def im2col(x_nhwc, ksize, stride, pad):
    """x: (N,H,W,C) -> patches (N*Ho*Wo, ksize*ksize*C), feature order (kh,kw,c)."""
    n, h, w, c = x_nhwc.shape
    xp = jnp.pad(x_nhwc, ((0, 0), (pad, pad), (pad, pad), (0, 0)))
    ho = (h + 2 * pad - ksize) // stride + 1
    wo = (w + 2 * pad - ksize) // stride + 1
    cols = []
    for kh in range(ksize):
        for kw in range(ksize):
            cols.append(xp[:, kh:kh + ho * stride:stride,
                           kw:kw + wo * stride:stride, :])
    patches = jnp.concatenate(cols, axis=-1)          # (N, Ho, Wo, k*k*C)
    return patches.reshape(n * ho * wo, ksize * ksize * c), (n, ho, wo)


def fold_bn(w_ochw, gamma, beta, mean, var):
    """PyTorch (Cout,Cin,kh,kw) + eval-BN -> (kh*kw*Cin, Cout) weight, (Cout,) bias."""
    c_out = w_ochw.shape[0]
    scale = gamma / jnp.sqrt(var + BN_EPS)             # (Cout,)
    shift = beta - mean * scale                        # (Cout,)
    w_mat = jnp.transpose(w_ochw, (2, 3, 1, 0)).reshape(-1, c_out)
    return w_mat * scale[None, :], shift


def discriminator_forward(x_nchw, enc_params, pred_params):
    # layout: NCHW at the boundary (PyTorch convention); NHWC / bf16 inside.
    x = jnp.transpose(x_nchw, (0, 2, 3, 1)).astype(jnp.bfloat16)
    n_layers = len(enc_params)

    sig = logit = None
    for li, (w, g, b_, m_, v_) in enumerate(enc_params):
        c_out = w.shape[0]
        w_mat, bias = fold_bn(w, g, b_, m_, v_)
        patches, (n, ho, wo) = im2col(x, ksize=3, stride=2, pad=1)
        if li < n_layers - 1:
            y = fused_conv_layer(patches, w_mat, bias)
            x = y.reshape(n, ho, wo, c_out)
        else:
            # Last encoder layer: fuse the 1x1 pred conv + BN + sigmoid.
            wp, gp, bp, mp, vp = pred_params
            wp_mat, bias_p = fold_bn(wp, gp, bp, mp, vp)   # (C_last, 1), (1,)
            s, lo = fused_conv_pred_layer(patches, w_mat, bias, wp_mat, bias_p)
            sig = s.reshape(n, ho, wo, 1)
            logit = lo.reshape(n, ho, wo, 1)

    sig_nchw = jnp.transpose(sig, (0, 3, 1, 2)).astype(jnp.float32)
    logit_nchw = jnp.transpose(logit, (0, 3, 1, 2)).astype(jnp.float32)
    return sig_nchw, logit_nchw


# ----------------------------------------------------------------------------
# Deterministic synthetic parameters (mirrors module __init__ shapes)
# ----------------------------------------------------------------------------
def init_params(key, num_convs):
    enc = []
    c_in = 3
    for i in range(num_convs):
        c_out = 2 ** (5 + i)
        key, k1, k2, k3, k4, k5 = jax.random.split(key, 6)
        w = 0.1 * jax.random.normal(k1, (c_out, c_in, 3, 3), jnp.float32)
        gamma = 1.0 + 0.1 * jax.random.normal(k2, (c_out,), jnp.float32)
        beta = 0.1 * jax.random.normal(k3, (c_out,), jnp.float32)
        mean = 0.1 * jax.random.normal(k4, (c_out,), jnp.float32)
        var = 0.5 + jax.random.uniform(k5, (c_out,), jnp.float32)
        enc.append((w, gamma, beta, mean, var))
        c_in = c_out
    key, k1, k2, k3, k4, k5 = jax.random.split(key, 6)
    w = 0.1 * jax.random.normal(k1, (1, c_in, 1, 1), jnp.float32)
    gamma = 1.0 + 0.1 * jax.random.normal(k2, (1,), jnp.float32)
    beta = 0.1 * jax.random.normal(k3, (1,), jnp.float32)
    mean = 0.1 * jax.random.normal(k4, (1,), jnp.float32)
    var = 0.5 + jax.random.uniform(k5, (1,), jnp.float32)
    pred = (w, gamma, beta, mean, var)
    return enc, pred


# ----------------------------------------------------------------------------
# Pure-JAX f32 reference (eval-mode BN), for correctness checking
# ----------------------------------------------------------------------------
def ref_forward(x_nchw, enc_params, pred_params):
    y = jnp.transpose(x_nchw, (0, 2, 3, 1)).astype(jnp.float32)
    for (w, g, b, m, v) in enc_params:
        w_hwio = jnp.transpose(w, (2, 3, 1, 0))
        y = jax.lax.conv_general_dilated(
            y, w_hwio, window_strides=(2, 2), padding=((1, 1), (1, 1)),
            dimension_numbers=("NHWC", "HWIO", "NHWC"))
        scale = g / jnp.sqrt(v + BN_EPS)
        y = y * scale + (b - m * scale)
        y = jnp.where(y >= 0.0, y, NEG_SLOPE * y)
    w, g, b, m, v = pred_params
    w_hwio = jnp.transpose(w, (2, 3, 1, 0))
    y = jax.lax.conv_general_dilated(
        y, w_hwio, window_strides=(1, 1), padding=((0, 0), (0, 0)),
        dimension_numbers=("NHWC", "HWIO", "NHWC"))
    scale = g / jnp.sqrt(v + BN_EPS)
    y = y * scale + (b - m * scale)
    y = jnp.transpose(y, (0, 3, 1, 2))
    return jax.nn.sigmoid(y), y


if __name__ == "__main__":
    num_convs = 2
    key = jax.random.PRNGKey(0)
    key, kx = jax.random.split(key)
    x = jax.random.normal(kx, (2, 3, 16, 16), jnp.float32)   # NCHW, like PyTorch

    enc_params, pred_params = init_params(key, num_convs)

    fwd = jax.jit(functools.partial(discriminator_forward,
                                    enc_params=enc_params,
                                    pred_params=pred_params))
    sig, logit = fwd(x)
    jax.block_until_ready((sig, logit))

    sig_ref, logit_ref = ref_forward(x, enc_params, pred_params)
    # bf16 matmul operands -> loosened tolerance (f32 accumulation throughout).
    np.testing.assert_allclose(np.asarray(logit), np.asarray(logit_ref),
                               rtol=3e-2, atol=3e-2)
    np.testing.assert_allclose(np.asarray(sig), np.asarray(sig_ref),
                               rtol=3e-2, atol=3e-2)
    assert sig.shape == (2, 1, 4, 4) and logit.shape == (2, 1, 4, 4)

    print("KERNEL_OK")
</pallas_src>

<mosaic_0001>
module attributes {stable_mosaic.version = 11 : i64} {
  func.func @_conv_bn_lrelu_kernel(%arg0: i32, %arg1: i32, %arg2: memref<128x128xbf16, #tpu.memory_space<vmem>>, %arg3: memref<128x32xbf16, #tpu.memory_space<vmem>>, %arg4: memref<1x32xf32, #tpu.memory_space<vmem>>, %arg5: memref<128x32xbf16, #tpu.memory_space<vmem>>, %arg6: memref<128x32xf32, #tpu.memory_space<vmem>>) attributes {dimension_semantics = [#tpu.dimension_semantics<parallel>, #tpu.dimension_semantics<arbitrary>], iteration_bounds = array<i64: 1, 1>, scalar_prefetch = 0 : i64, scratch_operands = 1 : i64, tpu.core_type = #tpu.core_type<tc>, window_params = [{transform_indices = @transform_0, window_bounds = array<i64: 128, 128>}, {transform_indices = @transform_1, window_bounds = array<i64: 128, 32>}, {pipeline_mode = #tpu.pipeline_mode<synchronous>, transform_indices = @transform_2, window_bounds = array<i64: 1, 32>}, {transform_indices = @transform_3, window_bounds = array<i64: 128, 32>}]} {
    %c0_i32 = arith.constant 0 : i32
    %0 = arith.cmpi eq, %arg1, %c0_i32 : i32
    %1 = arith.extui %0 : i1 to i32
    %c0_i32_0 = arith.constant 0 : i32
    %2 = arith.cmpi ne, %1, %c0_i32_0 : i32
    scf.if %2 {
      %cst_10 = arith.constant 0.000000e+00 : f32
      %12 = vector.broadcast %cst_10 : f32 to vector<128x32xf32>
      %c0_11 = arith.constant 0 : index
      %c0_12 = arith.constant 0 : index
      %13 = vector.load %arg6[%c0_11, %c0_12] : memref<128x32xf32, #tpu.memory_space<vmem>>, vector<128x32xf32>
      tpu.vector_store %arg6[%c0_11, %c0_12], %12 {strides = array<i32>} : memref<128x32xf32, #tpu.memory_space<vmem>>, vector<128x32xf32>,
    } else {
    }
    %c0 = arith.constant 0 : index
    %c0_1 = arith.constant 0 : index
    %3 = vector.load %arg6[%c0, %c0_1] : memref<128x32xf32, #tpu.memory_space<vmem>>, vector<128x32xf32>
    %c0_2 = arith.constant 0 : index
    %c0_3 = arith.constant 0 : index
    %4 = vector.load %arg2[%c0_2, %c0_3] : memref<128x128xbf16, #tpu.memory_space<vmem>>, vector<128x128xbf16>
    %c0_4 = arith.constant 0 : index
    %c0_5 = arith.constant 0 : index
    %5 = vector.load %arg3[%c0_4, %c0_5] : memref<128x32xbf16, #tpu.memory_space<vmem>>, vector<128x32xbf16>
    %cst = arith.constant dense<0.000000e+00> : vector<128x32xf32>
    %6 = tpu.matmul %4, %5, %cst {dimension_numbers = #tpu.dot_dimension_numbers<[1], [0], [0], [1], [0, 0, 1, 1], [], []>} : vector<128x128xbf16>, vector<128x32xbf16>, vector<128x32xf32> -> vector<128x32xf32>
    %7 = arith.addf %3, %6 : vector<128x32xf32>
    %c0_6 = arith.constant 0 : index
    %c0_7 = arith.constant 0 : index
    %8 = vector.load %arg6[%c0_6, %c0_7] : memref<128x32xf32, #tpu.memory_space<vmem>>, vector<128x32xf32>
    tpu.vector_store %arg6[%c0_6, %c0_7], %7 {strides = array<i32>} : memref<128x32xf32, #tpu.memory_space<vmem>>, vector<128x32xf32>,
    %c0_i32_8 = arith.constant 0 : i32
    %9 = arith.cmpi eq, %arg1, %c0_i32_8 : i32
    %10 = arith.extui %9 : i1 to i32
    %c0_i32_9 = arith.constant 0 : i32
    %11 = arith.cmpi ne, %10, %c0_i32_9 : i32
    scf.if %11 {
      %c0_10 = arith.constant 0 : index
      %c0_11 = arith.constant 0 : index
      %12 = vector.load %arg6[%c0_10, %c0_11] : memref<128x32xf32, #tpu.memory_space<vmem>>, vector<128x32xf32>
      %c0_12 = arith.constant 0 : index
      %c0_13 = arith.constant 0 : index
      %13 = vector.load %arg4[%c0_12, %c0_13] : memref<1x32xf32, #tpu.memory_space<vmem>>, vector<1x32xf32>
      %14 = vector.broadcast %13 : vector<1x32xf32> to vector<128x32xf32>
      %15 = arith.addf %12, %14 : vector<128x32xf32>
      %cst_14 = arith.constant 0.000000e+00 : f32
      %16 = vector.broadcast %cst_14 : f32 to vector<128x32xf32>
      %17 = arith.cmpf oge, %15, %16 : vector<128x32xf32>
      %cst_15 = arith.constant 2.000000e-01 : f32
      %18 = vector.broadcast %cst_15 : f32 to vector<128x32xf32>
      %19 = arith.mulf %18, %15 : vector<128x32xf32>
      %20 = arith.select %17, %15, %19 : vector<128x32xi1>, vector<128x32xf32>
      %21 = arith.truncf %20 : vector<128x32xf32> to vector<128x32xbf16>
      %c0_16 = arith.constant 0 : index
      %c0_17 = arith.constant 0 : index
      %22 = vector.load %arg5[%c0_16, %c0_17] : memref<128x32xbf16, #tpu.memory_space<vmem>>, vector<128x32xbf16>
      tpu.vector_store %arg5[%c0_16, %c0_17], %21 {strides = array<i32>} : memref<128x32xbf16, #tpu.memory_space<vmem>>, vector<128x32xbf16>,
    } else {
    }
    return
  }
  func.func @transform_0(%arg0: i32, %arg1: i32) -> (i32, i32) {
    %c0_i32 = arith.constant 0 : i32
    return %arg0, %arg1 : i32, i32
  }
  func.func @transform_1(%arg0: i32, %arg1: i32) -> (i32, i32) {
    %c0_i32 = arith.constant 0 : i32
    %c0_i32_0 = arith.constant 0 : i32
    return %arg1, %c0_i32 : i32, i32
  }
  func.func @transform_2(%arg0: i32, %arg1: i32) -> (i32, i32) {
    %c0_i32 = arith.constant 0 : i32
    %c0_i32_0 = arith.constant 0 : i32
    %c0_i32_1 = arith.constant 0 : i32
    return %c0_i32, %c0_i32_0 : i32, i32
  }
  func.func @transform_3(%arg0: i32, %arg1: i32) -> (i32, i32) {
    %c0_i32 = arith.constant 0 : i32
    %c0_i32_0 = arith.constant 0 : i32
    return %arg0, %c0_i32 : i32, i32
  }
}

module attributes {stable_mosaic.version = 11 : i64} {
  func.func @_conv_bn_lrelu_pred_kernel(%arg0: i32, %arg1: i32, %arg2: memref<32x384xbf16, #tpu.memory_space<vmem>>, %arg3: memref<384x64xbf16, #tpu.memory_space<vmem>>, %arg4: memref<1x64xf32, #tpu.memory_space<vmem>>, %arg5: memref<64x128xbf16, #tpu.memory_space<vmem>>, %arg6: memref<1x128xf32, #tpu.memory_space<vmem>>, %arg7: memref<32x128xf32, #tpu.memory_space<vmem>>, %arg8: memref<32x128xf32, #tpu.memory_space<vmem>>, %arg9: memref<32x64xf32, #tpu.memory_space<vmem>>) attributes {dimension_semantics = [#tpu.dimension_semantics<parallel>, #tpu.dimension_semantics<arbitrary>], iteration_bounds = array<i64: 1, 1>, scalar_prefetch = 0 : i64, scratch_operands = 1 : i64, tpu.core_type = #tpu.core_type<tc>, window_params = [{transform_indices = @transform_0, window_bounds = array<i64: 32, 384>}, {transform_indices = @transform_1, window_bounds = array<i64: 384, 64>}, {pipeline_mode = #tpu.pipeline_mode<synchronous>, transform_indices = @transform_2, window_bounds = array<i64: 1, 64>}, {pipeline_mode = #tpu.pipeline_mode<synchronous>, transform_indices = @transform_3, window_bounds = array<i64: 64, 128>}, {pipeline_mode = #tpu.pipeline_mode<synchronous>, transform_indices = @transform_4, window_bounds = array<i64: 1, 128>}, {transform_indices = @transform_5, window_bounds = array<i64: 32, 128>}, {transform_indices = @transform_6, window_bounds = array<i64: 32, 128>}]} {
    %c0_i32 = arith.constant 0 : i32
    %0 = arith.cmpi eq, %arg1, %c0_i32 : i32
    %1 = arith.extui %0 : i1 to i32
    %c0_i32_0 = arith.constant 0 : i32
    %2 = arith.cmpi ne, %1, %c0_i32_0 : i32
    scf.if %2 {
      %cst_10 = arith.constant 0.000000e+00 : f32
      %12 = vector.broadcast %cst_10 : f32 to vector<32x64xf32>
      %c0_11 = arith.constant 0 : index
      %c0_12 = arith.constant 0 : index
      %13 = vector.load %arg9[%c0_11, %c0_12] : memref<32x64xf32, #tpu.memory_space<vmem>>, vector<32x64xf32>
      tpu.vector_store %arg9[%c0_11, %c0_12], %12 {strides = array<i32>} : memref<32x64xf32, #tpu.memory_space<vmem>>, vector<32x64xf32>,
    } else {
    }
    %c0 = arith.constant 0 : index
    %c0_1 = arith.constant 0 : index
    %3 = vector.load %arg9[%c0, %c0_1] : memref<32x64xf32, #tpu.memory_space<vmem>>, vector<32x64xf32>
    %c0_2 = arith.constant 0 : index
    %c0_3 = arith.constant 0 : index
    %4 = vector.load %arg2[%c0_2, %c0_3] : memref<32x384xbf16, #tpu.memory_space<vmem>>, vector<32x384xbf16>
    %c0_4 = arith.constant 0 : index
    %c0_5 = arith.constant 0 : index
    %5 = vector.load %arg3[%c0_4, %c0_5] : memref<384x64xbf16, #tpu.memory_space<vmem>>, vector<384x64xbf16>
    %cst = arith.constant dense<0.000000e+00> : vector<32x64xf32>
    %6 = tpu.matmul %4, %5, %cst {dimension_numbers = #tpu.dot_dimension_numbers<[1], [0], [0], [1], [0, 0, 1, 1], [], []>} : vector<32x384xbf16>, vector<384x64xbf16>, vector<32x64xf32> -> vector<32x64xf32>
    %7 = arith.addf %3, %6 : vector<32x64xf32>
    %c0_6 = arith.constant 0 : index
    %c0_7 = arith.constant 0 : index
    %8 = vector.load %arg9[%c0_6, %c0_7] : memref<32x64xf32, #tpu.memory_space<vmem>>, vector<32x64xf32>
    tpu.vector_store %arg9[%c0_6, %c0_7], %7 {strides = array<i32>} : memref<32x64xf32, #tpu.memory_space<vmem>>, vector<32x64xf32>,
    %c0_i32_8 = arith.constant 0 : i32
    %9 = arith.cmpi eq, %arg1, %c0_i32_8 : i32
    %10 = arith.extui %9 : i1 to i32
    %c0_i32_9 = arith.constant 0 : i32
    %11 = arith.cmpi ne, %10, %c0_i32_9 : i32
    scf.if %11 {
      %c0_10 = arith.constant 0 : index
      %c0_11 = arith.constant 0 : index
      %12 = vector.load %arg9[%c0_10, %c0_11] : memref<32x64xf32, #tpu.memory_space<vmem>>, vector<32x64xf32>
      %c0_12 = arith.constant 0 : index
      %c0_13 = arith.constant 0 : index
      %13 = vector.load %arg4[%c0_12, %c0_13] : memref<1x64xf32, #tpu.memory_space<vmem>>, vector<1x64xf32>
      %14 = vector.broadcast %13 : vector<1x64xf32> to vector<32x64xf32>
      %15 = arith.addf %12, %14 : vector<32x64xf32>
      %cst_14 = arith.constant 0.000000e+00 : f32
      %16 = vector.broadcast %cst_14 : f32 to vector<32x64xf32>
      %17 = arith.cmpf oge, %15, %16 : vector<32x64xf32>
      %cst_15 = arith.constant 2.000000e-01 : f32
      %18 = vector.broadcast %cst_15 : f32 to vector<32x64xf32>
      %19 = arith.mulf %18, %15 : vector<32x64xf32>
      %20 = arith.select %17, %15, %19 : vector<32x64xi1>, vector<32x64xf32>
      %21 = arith.truncf %20 : vector<32x64xf32> to vector<32x64xbf16>
      %c0_16 = arith.constant 0 : index
      %c0_17 = arith.constant 0 : index
      %22 = vector.load %arg5[%c0_16, %c0_17] : memref<64x128xbf16, #tpu.memory_space<vmem>>, vector<64x128xbf16>
      %cst_18 = arith.constant dense<0.000000e+00> : vector<32x128xf32>
      %23 = tpu.matmul %21, %22, %cst_18 {dimension_numbers = #tpu.dot_dimension_numbers<[1], [0], [0], [1], [0, 0, 1, 1], [], []>} : vector<32x64xbf16>, vector<64x128xbf16>, vector<32x128xf32> -> vector<32x128xf32>
      %c0_19 = arith.constant 0 : index
      %c0_20 = arith.constant 0 : index
      %24 = vector.load %arg6[%c0_19, %c0_20] : memref<1x128xf32, #tpu.memory_space<vmem>>, vector<1x128xf32>
      %25 = vector.broadcast %24 : vector<1x128xf32> to vector<32x128xf32>
      %26 = arith.addf %23, %25 : vector<32x128xf32>
      %c0_21 = arith.constant 0 : index
      %c0_22 = arith.constant 0 : index
      %27 = vector.load %arg8[%c0_21, %c0_22] : memref<32x128xf32, #tpu.memory_space<vmem>>, vector<32x128xf32>
      tpu.vector_store %arg8[%c0_21, %c0_22], %26 {strides = array<i32>} : memref<32x128xf32, #tpu.memory_space<vmem>>, vector<32x128xf32>,
      %28 = arith.negf %26 : vector<32x128xf32>
      %29 = math.exp %28 : vector<32x128xf32>
      %cst_23 = arith.constant 1.000000e+00 : f32
      %30 = vector.broadcast %cst_23 : f32 to vector<32x128xf32>
      %31 = arith.addf %30, %29 : vector<32x128xf32>
      %32 = arith.divf %30, %31 : vector<32x128xf32>
      %c0_24 = arith.constant 0 : index
      %c0_25 = arith.constant 0 : index
      %33 = vector.load %arg7[%c0_24, %c0_25] : memref<32x128xf32, #tpu.memory_space<vmem>>, vector<32x128xf32>
      tpu.vector_store %arg7[%c0_24, %c0_25], %32 {strides = array<i32>} : memref<32x128xf32, #tpu.memory_space<vmem>>, vector<32x128xf32>,
    } else {
    }
    return
  }
  func.func @transform_0(%arg0: i32, %arg1: i32) -> (i32, i32) {
    %c0_i32 = arith.constant 0 : i32
    return %arg0, %arg1 : i32, i32
  }
  func.func @transform_1(%arg0: i32, %arg1: i32) -> (i32, i32) {
    %c0_i32 = arith.constant 0 : i32
    %c0_i32_0 = arith.constant 0 : i32
    return %arg1, %c0_i32 : i32, i32
  }
  func.func @transform_2(%arg0: i32, %arg1: i32) -> (i32, i32) {
    %c0_i32 = arith.constant 0 : i32
    %c0_i32_0 = arith.constant 0 : i32
    %c0_i32_1 = arith.constant 0 : i32
    return %c0_i32, %c0_i32_0 : i32, i32
  }
  func.func @transform_3(%arg0: i32, %arg1: i32) -> (i32, i32) {
    %c0_i32 = arith.constant 0 : i32
    %c0_i32_0 = arith.constant 0 : i32
    %c0_i32_1 = arith.constant 0 : i32
    return %c0_i32, %c0_i32_0 : i32, i32
  }
  func.func @transform_4(%arg0: i32, %arg1: i32) -> (i32, i32) {
    %c0_i32 = arith.constant 0 : i32
    %c0_i32_0 = arith.constant 0 : i32
    %c0_i32_1 = arith.constant 0 : i32
    return %c0_i32, %c0_i32_0 : i32, i32
  }
  func.func @transform_5(%arg0: i32, %arg1: i32) -> (i32, i32) {
    %c0_i32 = arith.constant 0 : i32
    %c0_i32_0 = arith.constant 0 : i32
    return %arg0, %c0_i32 : i32, i32
  }
  func.func @transform_6(%arg0: i32, %arg1: i32) -> (i32, i32) {
    %c0_i32 = arith.constant 0 : i32
    %c0_i32_0 = arith.constant 0 : i32
    return %arg0, %c0_i32 : i32, i32
  }
}

</mosaic_0001>

<llo_original>
// kernel: discriminator_forward.2
$region0: #{discriminator_forward.2}
  #allocation0 [shape = 'u32[]', space=smem, size = 0x4, offset = 0x4, fixed_abs, tag = 'smem constant byte address 0x4 - core index']
  #allocation1 [shape = 'u32[144,128]{1,0:T(1,128)}', space=vmem, size = 0x12000, scoped, tag = 'internal scratch']
  #allocation2 [shape = 'f32[128,32]{1,0:T(8,128)}', space=vmem, size = 0x10000, scoped, tag = 'scratch operand']
  %s0 = inlined_call_operand.vmem [shape: bf16[128,128], index: 0, kind: input, shape index: {}]
  %s1 = inlined_call_operand.vmem [shape: bf16[128,32], index: 1, kind: input, shape index: {}]
  %s2 = inlined_call_operand.vmem [shape: f32[1,32], index: 2, kind: input, shape index: {}]
  %s3 = inlined_call_operand.vmem [shape: bf16[128,32], index: 3, kind: output, shape index: {}]
  %s4 = sld [smem:[#allocation0]]
  $region30: #{discriminator_forward.2} parent=0
    _
  %s6 = ssub.s32 1, %s4
  %s7 = scalar_select 0, %s6, %s4
  // Predicated region
  $region2: #{discriminator_forward.2} parent=0 // pred_check
    _
  $region3: #{discriminator_forward.2} parent=0 // pred_check_branch
    %9 = sbr.rel (0) target = $region5
  $region4: #{discriminator_forward.2} parent=0 // pred_region
    _
  $region5: #{discriminator_forward.2} parent=0 // pred_fallthru
    _
  // Predicated region
  $region6: #{discriminator_forward.2} parent=0 // pred_check
    _
  $region7: #{discriminator_forward.2} parent=0 // pred_check_branch
    %11 = sbr.rel (0) target = $region9
  $region8: #{discriminator_forward.2} parent=0 // pred_region
    _
  $region9: #{discriminator_forward.2} parent=0 // pred_fallthru
    _
  // Predicated region
  $region10: #{discriminator_forward.2} parent=0 // pred_check
    _
  $region11: #{discriminator_forward.2} parent=0 // pred_check_branch
    %13 = sbr.rel (0) target = $region13
  $region12: #{discriminator_forward.2} parent=0 // pred_region
    _
  $region13: #{discriminator_forward.2} parent=0 // pred_fallthru
    _
  %p15 = scmp.eq.s32.totalorder 0, 0
  // Predicated region
  $region14: #{discriminator_forward.2} parent=0 // pred_check
    %p16 = pneg %p15
  $region15: #{discriminator_forward.2} parent=0 // pred_check_branch
    %18 = sbr.rel (%p16) target = $region17
  $region16: #{discriminator_forward.2} parent=0 // pred_region
    %vm19 = vcmask 261120
    %20 = vst.msk [vmem:[#allocation2] sm:$0xff] %vm19, 0.0
    %21 = vst.msk [vmem:[#allocation2 + $0x8] sm:$0xff] %vm19, 0.0
    %22 = vst.msk [vmem:[#allocation2 + $0x10] sm:$0xff] %vm19, 0.0
    %23 = vst.msk [vmem:[#allocation2 + $0x18] sm:$0xff] %vm19, 0.0
    %24 = vst.msk [vmem:[#allocation2 + $0x20] sm:$0xff] %vm19, 0.0
    %25 = vst.msk [vmem:[#allocation2 + $0x28] sm:$0xff] %vm19, 0.0
    %26 = vst.msk [vmem:[#allocation2 + $0x30] sm:$0xff] %vm19, 0.0
    %27 = vst.msk [vmem:[#allocation2 + $0x38] sm:$0xff] %vm19, 0.0
    %28 = vst.msk [vmem:[#allocation2 + $0x40] sm:$0xff] %vm19, 0.0
    %29 = vst.msk [vmem:[#allocation2 + $0x48] sm:$0xff] %vm19, 0.0
    %30 = vst.msk [vmem:[#allocation2 + $0x50] sm:$0xff] %vm19, 0.0
    %31 = vst.msk [vmem:[#allocation2 + $0x58] sm:$0xff] %vm19, 0.0
    %32 = vst.msk [vmem:[#allocation2 + $0x60] sm:$0xff] %vm19, 0.0
    %33 = vst.msk [vmem:[#allocation2 + $0x68] sm:$0xff] %vm19, 0.0
    %34 = vst.msk [vmem:[#allocation2 + $0x70] sm:$0xff] %vm19, 0.0
    %35 = vst.msk [vmem:[#allocation2 + $0x78] sm:$0xff] %vm19, 0.0
  $region17: #{discriminator_forward.2} parent=0 // pred_fallthru
    _
  %v36 = vld [vmem:[#allocation2] sm:$0xff]
  %v37 = vld [vmem:[#allocation2 + $0x8] sm:$0xff]
  %v38 = vld [vmem:[#allocation2 + $0x10] sm:$0xff]
  %v39 = vld [vmem:[#allocation2 + $0x18] sm:$0xff]
  %v40 = vld [vmem:[#allocation2 + $0x20] sm:$0xff]
  %v41 = vld [vmem:[#allocation2 + $0x28] sm:$0xff]
  %v42 = vld [vmem:[#allocation2 + $0x30] sm:$0xff]
  %v43 = vld [vmem:[#allocation2 + $0x38] sm:$0xff]
  %v44 = vld [vmem:[#allocation2 + $0x40] sm:$0xff]
  %v45 = vld [vmem:[#allocation2 + $0x48] sm:$0xff]
  %v46 = vld [vmem:[#allocation2 + $0x50] sm:$0xff]
  %v47 = vld [vmem:[#allocation2 + $0x58] sm:$0xff]
  %v48 = vld [vmem:[#allocation2 + $0x60] sm:$0xff]
  %v49 = vld [vmem:[#allocation2 + $0x68] sm:$0xff]
  %v50 = vld [vmem:[#allocation2 + $0x70] sm:$0xff]
  %v51 = vld [vmem:[#allocation2 + $0x78] sm:$0xff]
  %v52 = vld [vmem:[%s0] sm:$0xf]
  %v53 = vld [vmem:[%s0 + $0x4] sm:$0xf]
  %v54 = vld [vmem:[%s0 + $0x8] sm:$0xf]
  %v55 = vld [vmem:[%s0 + $0xc] sm:$0xf]
  %v56 = vld [vmem:[%s0 + $0x10] sm:$0xf]
  %v57 = vld [vmem:[%s0 + $0x14] sm:$0xf]
  %v58 = vld [vmem:[%s0 + $0x18] sm:$0xf]
  %v59 = vld [vmem:[%s0 + $0x1c] sm:$0xf]
  %v60 = vld [vmem:[%s0 + $0x20] sm:$0xf]
  %v61 = vld [vmem:[%s0 + $0x24] sm:$0xf]
  %v62 = vld [vmem:[%s0 + $0x28] sm:$0xf]
  %v63 = vld [vmem:[%s0 + $0x2c] sm:$0xf]
  %v64 = vld [vmem:[%s0 + $0x30] sm:$0xf]
  %v65 = vld [vmem:[%s0 + $0x34] sm:$0xf]
  %v66 = vld [vmem:[%s0 + $0x38] sm:$0xf]
  %v67 = vld [vmem:[%s0 + $0x3c] sm:$0xf]
  %v68 = vld [vmem:[%s1] sm:$0xf]
  %v69 = vld [vmem:[%s1 + $0x4] sm:$0xf]
  %v70 = vld [vmem:[%s1 + $0x8] sm:$0xf]
  %v71 = vld [vmem:[%s1 + $0xc] sm:$0xf]
  %v72 = vld [vmem:[%s1 + $0x10] sm:$0xf]
  %v73 = vld [vmem:[%s1 + $0x14] sm:$0xf]
  %v74 = vld [vmem:[%s1 + $0x18] sm:$0xf]
  %v75 = vld [vmem:[%s1 + $0x1c] sm:$0xf]
  %v76 = vld [vmem:[%s1 + $0x20] sm:$0xf]
  %v77 = vld [vmem:[%s1 + $0x24] sm:$0xf]
  %v78 = vld [vmem:[%s1 + $0x28] sm:$0xf]
  %v79 = vld [vmem:[%s1 + $0x2c] sm:$0xf]
  %v80 = vld [vmem:[%s1 + $0x30] sm:$0xf]
  %v81 = vld [vmem:[%s1 + $0x34] sm:$0xf]
  %v82 = vld [vmem:[%s1 + $0x38] sm:$0xf]
  %v83 = vld [vmem:[%s1 + $0x3c] sm:$0xf]
  %v100 = vunpack.c.l.b16 %v52
  %v101 = vunpack.c.l.b16 %v53
  %v102 = vunpack.c.l.b16 %v54
  %v103 = vunpack.c.l.b16 %v55
  %v104 = vunpack.c.l.b16 %v56
  %v105 = vunpack.c.l.b16 %v57
  %v106 = vunpack.c.l.b16 %v58
  %v107 = vunpack.c.l.b16 %v59
  %v108 = vunpack.c.l.b16 %v60
  %v109 = vunpack.c.l.b16 %v61
  %v110 = vunpack.c.l.b16 %v62
  %v111 = vunpack.c.l.b16 %v63
  %v112 = vunpack.c.l.b16 %v64
  %v113 = vunpack.c.l.b16 %v65
  %v114 = vunpack.c.l.b16 %v66
  %v115 = vunpack.c.l.b16 %v67
  %v116 = vpack.c.b16 %v101, %v100
  %v117 = vpack.c.b16 %v103, %v102
  %v118 = vpack.c.b16 %v105, %v104
  %v119 = vpack.c.b16 %v107, %v106
  %v120 = vpack.c.b16 %v109, %v108
  %v121 = vpack.c.b16 %v111, %v110
  %v122 = vpack.c.b16 %v113, %v112
  %v123 = vpack.c.b16 %v115, %v114
  %v148 = vunpack.c.l.b16 %v68
  %v149 = vunpack.c.l.b16 %v69
  %v150 = vunpack.c.l.b16 %v70
  %v151 = vunpack.c.l.b16 %v71
  %v152 = vunpack.c.l.b16 %v72
  %v153 = vunpack.c.l.b16 %v73
  %v154 = vunpack.c.l.b16 %v74
  %v155 = vunpack.c.l.b16 %v75
  %v156 = vunpack.c.l.b16 %v76
  %v157 = vunpack.c.l.b16 %v77
  %v158 = vunpack.c.l.b16 %v78
  %v159 = vunpack.c.l.b16 %v79
  %v160 = vunpack.c.l.b16 %v80
  %v161 = vunpack.c.l.b16 %v81
  %v162 = vunpack.c.l.b16 %v82
  %v163 = vunpack.c.l.b16 %v83
  %v164 = vpack.c.b16 %v149, %v148
  %v165 = vpack.c.b16 %v151, %v150
  %v166 = vpack.c.b16 %v153, %v152
  %v167 = vpack.c.b16 %v155, %v154
  %v168 = vpack.c.b16 %v157, %v156
  %v169 = vpack.c.b16 %v159, %v158
  %v170 = vpack.c.b16 %v161, %v160
  %v171 = vpack.c.b16 %v163, %v162
  %180 = vmatprep.subr.bf16.mxu0 0
  %181 = vmatpush1.bf16.msra.mxu0 %v164
  %182 = vmatprep.subr.bf16.mxu0 0
  %183 = vmatpush1.bf16.msra.mxu0 %v165
  %184 = vmatprep.subr.bf16.mxu0 0
  %185 = vmatpush1.bf16.msra.mxu0 %v166
  %186 = vmatprep.subr.bf16.mxu0 0
  %187 = vmatpush1.bf16.msra.mxu0 %v167
  %188 = vmatprep.subr.bf16.mxu0 0
  %189 = vmatpush1.bf16.msra.mxu0 %v168
  %190 = vmatprep.subr.bf16.mxu0 0
  %191 = vmatpush1.bf16.msra.mxu0 %v169
  %192 = vmatprep.subr.bf16.mxu0 0
  %193 = vmatpush1.bf16.msra.mxu0 %v170
  %194 = vmatprep.subr.bf16.mxu0 0
  %195 = vmatpush1.bf16.msra.mxu0 %v171
  %196 = vmatprep.subr.bf16.mxu0 0
  %197 = vmatpush1.bf16.msra.mxu0 0
  %198 = vmatprep.subr.bf16.mxu0 0
  %199 = vmatpush1.bf16.msra.mxu0 0
  %200 = vmatprep.subr.bf16.mxu0 0
  %201 = vmatpush1.bf16.msra.mxu0 0
  %202 = vmatprep.subr.bf16.mxu0 0
  %203 = vmatpush1.bf16.msra.mxu0 0
  %204 = vmatprep.subr.bf16.mxu0 0
  %205 = vmatpush1.bf16.msra.mxu0 0
  %206 = vmatprep.subr.bf16.mxu0 0
  %207 = vmatpush1.bf16.msra.mxu0 0
  %208 = vmatprep.subr.bf16.mxu0 0
  %209 = vmatpush1.bf16.msra.mxu0 0
  %210 = vmatprep.subr.bf16.mxu0 0
  %211 = vmatpush1.bf16.msra.mxu0 0
  %212 = vmatprep.mubr.bf16.mxu0 0
  %213 = vmatmul.mubr.bf16.gmra.mrb[0].mxu0 %v116
  %v214 = vpop.f32.mrb[0].mxu0
  %v215 = vadd.f32 0.0, %v214
  %v216 = vpop.f32.mrb[0].mxu0
  %v217 = vpop.f32.mrb[0].mxu0
  %v218 = vadd.f32 0.0, %v217
  %v219 = vpop.f32.mrb[0].mxu0
  %220 = vmatprep.mubr.bf16.mxu0 0
  %221 = vmatmul.mubr.bf16.gmra.mrb[0].mxu0 %v117
  %v222 = vpop.f32.mrb[0].mxu0
  %v223 = vadd.f32 0.0, %v222
  %v224 = vpop.f32.mrb[0].mxu0
  %v225 = vpop.f32.mrb[0].mxu0
  %v226 = vadd.f32 0.0, %v225
  %v227 = vpop.f32.mrb[0].mxu0
  %228 = vmatprep.mubr.bf16.mxu0 0
  %229 = vmatmul.mubr.bf16.gmra.mrb[0].mxu0 %v118
  %v230 = vpop.f32.mrb[0].mxu0
  %v231 = vadd.f32 0.0, %v230
  %v232 = vpop.f32.mrb[0].mxu0
  %v233 = vpop.f32.mrb[0].mxu0
  %v234 = vadd.f32 0.0, %v233
  %v235 = vpop.f32.mrb[0].mxu0
  %236 = vmatprep.mubr.bf16.mxu0 0
  %237 = vmatmul.mubr.bf16.gmra.mrb[0].mxu0 %v119
  %v238 = vpop.f32.mrb[0].mxu0
  %v239 = vadd.f32 0.0, %v238
  %v240 = vpop.f32.mrb[0].mxu0
  %v241 = vpop.f32.mrb[0].mxu0
  %v242 = vadd.f32 0.0, %v241
  %v243 = vpop.f32.mrb[0].mxu0
  %244 = vmatprep.mubr.bf16.mxu0 0
  %245 = vmatmul.mubr.bf16.gmra.mrb[0].mxu0 %v120
  %v246 = vpop.f32.mrb[0].mxu0
  %v247 = vadd.f32 0.0, %v246
  %v248 = vpop.f32.mrb[0].mxu0
  %v249 = vpop.f32.mrb[0].mxu0
  %v250 = vadd.f32 0.0, %v249
  %v251 = vpop.f32.mrb[0].mxu0
  %252 = vmatprep.mubr.bf16.mxu0 0
  %253 = vmatmul.mubr.bf16.gmra.mrb[0].mxu0 %v121
  %v254 = vpop.f32.mrb[0].mxu0
  %v255 = vadd.f32 0.0, %v254
  %v256 = vpop.f32.mrb[0].mxu0
  %v257 = vpop.f32.mrb[0].mxu0
  %v258 = vadd.f32 0.0, %v257
  %v259 = vpop.f32.mrb[0].mxu0
  %260 = vmatprep.mubr.bf16.mxu0 0
  %261 = vmatmul.mubr.bf16.gmra.mrb[0].mxu0 %v122
  %v262 = vpop.f32.mrb[0].mxu0
  %v263 = vadd.f32 0.0, %v262
  %v264 = vpop.f32.mrb[0].mxu0
  %v265 = vpop.f32.mrb[0].mxu0
  %v266 = vadd.f32 0.0, %v265
  %v267 = vpop.f32.mrb[0].mxu0
  %268 = vmatprep.mubr.bf16.mxu0 0
  %269 = vmatmul.mubr.bf16.gmra.mrb[0].mxu0 %v123
  %v270 = vpop.f32.mrb[0].mxu0
  %v271 = vadd.f32 0.0, %v270
  %v272 = vpop.f32.mrb[0].mxu0
  %v273 = vpop.f32.mrb[0].mxu0
  %v274 = vadd.f32 0.0, %v273
  %v275 = vpop.f32.mrb[0].mxu0
  %276 = vdwg.mxu0
  %v277 = vadd.f32 %v36, %v215
  %v278 = vadd.f32 %v37, %v218
  %v279 = vadd.f32 %v38, %v223
  %v280 = vadd.f32 %v39, %v226
  %v281 = vadd.f32 %v40, %v231
  %v282 = vadd.f32 %v41, %v234
  %v283 = vadd.f32 %v42, %v239
  %v284 = vadd.f32 %v43, %v242
  %v285 = vadd.f32 %v44, %v247
  %v286 = vadd.f32 %v45, %v250
  %v287 = vadd.f32 %v46, %v255
  %v288 = vadd.f32 %v47, %v258
  %v289 = vadd.f32 %v48, %v263
  %v290 = vadd.f32 %v49, %v266
  %v291 = vadd.f32 %v50, %v271
  %v292 = vadd.f32 %v51, %v274
  %vm293 = vcmask 261120
  %294 = vst.msk [vmem:[#allocation2] sm:$0xff] %vm293, %v277
  %295 = vst.msk [vmem:[#allocation2 + $0x8] sm:$0xff] %vm293, %v278
  %296 = vst.msk [vmem:[#allocation2 + $0x10] sm:$0xff] %vm293, %v279
  %297 = vst.msk [vmem:[#allocation2 + $0x18] sm:$0xff] %vm293, %v280
  %298 = vst.msk [vmem:[#allocation2 + $0x20] sm:$0xff] %vm293, %v281
  %299 = vst.msk [vmem:[#allocation2 + $0x28] sm:$0xff] %vm293, %v282
  %300 = vst.msk [vmem:[#allocation2 + $0x30] sm:$0xff] %vm293, %v283
  %301 = vst.msk [vmem:[#allocation2 + $0x38] sm:$0xff] %vm293, %v284
  %302 = vst.msk [vmem:[#allocation2 + $0x40] sm:$0xff] %vm293, %v285
  %303 = vst.msk [vmem:[#allocation2 + $0x48] sm:$0xff] %vm293, %v286
  %304 = vst.msk [vmem:[#allocation2 + $0x50] sm:$0xff] %vm293, %v287
  %305 = vst.msk [vmem:[#allocation2 + $0x58] sm:$0xff] %vm293, %v288
  %306 = vst.msk [vmem:[#allocation2 + $0x60] sm:$0xff] %vm293, %v289
  %307 = vst.msk [vmem:[#allocation2 + $0x68] sm:$0xff] %vm293, %v290
  %308 = vst.msk [vmem:[#allocation2 + $0x70] sm:$0xff] %vm293, %v291
  %309 = vst.msk [vmem:[#allocation2 + $0x78] sm:$0xff] %vm293, %v292
  // Predicated region
  $region18: #{discriminator_forward.2} parent=0 // pred_check
    %p310 = pneg %p15
  $region19: #{discriminator_forward.2} parent=0 // pred_check_branch
    %312 = sbr.rel (%p310) target = $region21
  $region20: #{discriminator_forward.2} parent=0 // pred_region
    %v313 = vld [vmem:[#allocation2] sm:$0xff]
    %v314 = vld [vmem:[#allocation2 + $0x8] sm:$0xff]
    %v315 = vld [vmem:[#allocation2 + $0x10] sm:$0xff]
    %v316 = vld [vmem:[#allocation2 + $0x18] sm:$0xff]
    %v317 = vld [vmem:[#allocation2 + $0x20] sm:$0xff]
    %v318 = vld [vmem:[#allocation2 + $0x28] sm:$0xff]
    %v319 = vld [vmem:[#allocation2 + $0x30] sm:$0xff]
    %v320 = vld [vmem:[#allocation2 + $0x38] sm:$0xff]
    %v321 = vld [vmem:[#allocation2 + $0x40] sm:$0xff]
    %v322 = vld [vmem:[#allocation2 + $0x48] sm:$0xff]
    %v323 = vld [vmem:[#allocation2 + $0x50] sm:$0xff]
    %v324 = vld [vmem:[#allocation2 + $0x58] sm:$0xff]
    %v325 = vld [vmem:[#allocation2 + $0x60] sm:$0xff]
    %v326 = vld [vmem:[#allocation2 + $0x68] sm:$0xff]
    %v327 = vld [vmem:[#allocation2 + $0x70] sm:$0xff]
    %v328 = vld [vmem:[#allocation2 + $0x78] sm:$0xff]
    %v329 = vld [vmem:[%s2] sm:$0x1]
    %v331 = vlaneseq
    %v332 = vshrl.u32 %v331, 7
    %v333 = vsub.s32 0, %v332
    %v334 = vrot.slane %v329, %v333
    %v336 = vadd.f32 %v313, %v334
    %v337 = vadd.f32 %v314, %v334
    %v338 = vadd.f32 %v315, %v334
    %v339 = vadd.f32 %v316, %v334
    %v340 = vadd.f32 %v317, %v334
    %v341 = vadd.f32 %v318, %v334
    %v342 = vadd.f32 %v319, %v334
    %v343 = vadd.f32 %v320, %v334
    %v344 = vadd.f32 %v321, %v334
    %v345 = vadd.f32 %v322, %v334
    %v346 = vadd.f32 %v323, %v334
    %v347 = vadd.f32 %v324, %v334
    %v348 = vadd.f32 %v325, %v334
    %v349 = vadd.f32 %v326, %v334
    %v350 = vadd.f32 %v327, %v334
    %v351 = vadd.f32 %v328, %v334
    %vm352 = vcmp.ge.f32.partialorder %v336, 0.0
    %vm353 = vcmp.ge.f32.partialorder %v337, 0.0
    %vm354 = vcmp.ge.f32.partialorder %v338, 0.0
    %vm355 = vcmp.ge.f32.partialorder %v339, 0.0
    %vm356 = vcmp.ge.f32.partialorder %v340, 0.0
    %vm357 = vcmp.ge.f32.partialorder %v341, 0.0
    %vm358 = vcmp.ge.f32.partialorder %v342, 0.0
    %vm359 = vcmp.ge.f32.partialorder %v343, 0.0
    %vm360 = vcmp.ge.f32.partialorder %v344, 0.0
    %vm361 = vcmp.ge.f32.partialorder %v345, 0.0
    %vm362 = vcmp.ge.f32.partialorder %v346, 0.0
    %vm363 = vcmp.ge.f32.partialorder %v347, 0.0
    %vm364 = vcmp.ge.f32.partialorder %v348, 0.0
    %vm365 = vcmp.ge.f32.partialorder %v349, 0.0
    %vm366 = vcmp.ge.f32.partialorder %v350, 0.0
    %vm367 = vcmp.ge.f32.partialorder %v351, 0.0
    %v368 = vmul.f32 %v336, 0.2
    %v369 = vmul.f32 %v337, 0.2
    %v370 = vmul.f32 %v338, 0.2
    %v371 = vmul.f32 %v339, 0.2
    %v372 = vmul.f32 %v340, 0.2
    %v373 = vmul.f32 %v341, 0.2
    %v374 = vmul.f32 %v342, 0.2
    %v375 = vmul.f32 %v343, 0.2
    %v376 = vmul.f32 %v344, 0.2
    %v377 = vmul.f32 %v345, 0.2
    %v378 = vmul.f32 %v346, 0.2
    %v379 = vmul.f32 %v347, 0.2
    %v380 = vmul.f32 %v348, 0.2
    %v381 = vmul.f32 %v349, 0.2
    %v382 = vmul.f32 %v350, 0.2
    %v383 = vmul.f32 %v351, 0.2
    %v384 = vsel %vm352, %v336, %v368
    %v385 = vsel %vm353, %v337, %v369
    %v386 = vsel %vm354, %v338, %v370
    %v387 = vsel %vm355, %v339, %v371
    %v388 = vsel %vm356, %v340, %v372
    %v389 = vsel %vm357, %v341, %v373
    %v390 = vsel %vm358, %v342, %v374
    %v391 = vsel %vm359, %v343, %v375
    %v392 = vsel %vm360, %v344, %v376
    %v393 = vsel %vm361, %v345, %v377
    %v394 = vsel %vm362, %v346, %v378
    %v395 = vsel %vm363, %v347, %v379
    %v396 = vsel %vm364, %v348, %v380
    %v397 = vsel %vm365, %v349, %v381
    %v398 = vsel %vm366, %v350, %v382
    %v399 = vsel %vm367, %v351, %v383
    %v400 = vpack.c.bf16 %v385, %v384
    %v401 = vpack.c.bf16 %v387, %v386
    %v402 = vpack.c.bf16 %v389, %v388
    %v403 = vpack.c.bf16 %v391, %v390
    %v404 = vpack.c.bf16 %v393, %v392
    %v405 = vpack.c.bf16 %v395, %v394
    %v406 = vpack.c.bf16 %v397, %v396
    %v407 = vpack.c.bf16 %v399, %v398
    %v416 = vunpack.c.l.b16 %v400
    %v417 = vunpack.c.h.b16 %v400
    %v418 = vunpack.c.l.b16 %v401
    %v419 = vunpack.c.h.b16 %v401
    %v420 = vunpack.c.l.b16 %v402
    %v421 = vunpack.c.h.b16 %v402
    %v422 = vunpack.c.l.b16 %v403
    %v423 = vunpack.c.h.b16 %v403
    %v424 = vunpack.c.l.b16 %v404
    %v425 = vunpack.c.h.b16 %v404
    %v426 = vunpack.c.l.b16 %v405
    %v427 = vunpack.c.h.b16 %v405
    %v428 = vunpack.c.l.b16 %v406
    %v429 = vunpack.c.h.b16 %v406
    %v430 = vunpack.c.l.b16 %v407
    %v431 = vunpack.c.h.b16 %v407
    %v432 = vpack.c.b16 %v416, %v416
    %v433 = vpack.c.b16 %v417, %v417
    %v434 = vpack.c.b16 %v418, %v418
    %v435 = vpack.c.b16 %v419, %v419
    %v436 = vpack.c.b16 %v420, %v420
    %v437 = vpack.c.b16 %v421, %v421
    %v438 = vpack.c.b16 %v422, %v422
    %v439 = vpack.c.b16 %v423, %v423
    %v440 = vpack.c.b16 %v424, %v424
    %v441 = vpack.c.b16 %v425, %v425
    %v442 = vpack.c.b16 %v426, %v426
    %v443 = vpack.c.b16 %v427, %v427
    %v444 = vpack.c.b16 %v428, %v428
    %v445 = vpack.c.b16 %v429, %v429
    %v446 = vpack.c.b16 %v430, %v430
    %v447 = vpack.c.b16 %v431, %v431
    %vm464 = vcmask 257024
    %465 = vst.msk [vmem:[%s3] sm:$0xf] %vm464, %v432
    %466 = vst.msk [vmem:[%s3 + $0x4] sm:$0xf] %vm464, %v433
    %467 = vst.msk [vmem:[%s3 + $0x8] sm:$0xf] %vm464, %v434
    %468 = vst.msk [vmem:[%s3 + $0xc] sm:$0xf] %vm464, %v435
    %469 = vst.msk [vmem:[%s3 + $0x10] sm:$0xf] %vm464, %v436
    %470 = vst.msk [vmem:[%s3 + $0x14] sm:$0xf] %vm464, %v437
    %471 = vst.msk [vmem:[%s3 + $0x18] sm:$0xf] %vm464, %v438
    %472 = vst.msk [vmem:[%s3 + $0x1c] sm:$0xf] %vm464, %v439
    %473 = vst.msk [vmem:[%s3 + $0x20] sm:$0xf] %vm464, %v440
    %474 = vst.msk [vmem:[%s3 + $0x24] sm:$0xf] %vm464, %v441
    %475 = vst.msk [vmem:[%s3 + $0x28] sm:$0xf] %vm464, %v442
    %476 = vst.msk [vmem:[%s3 + $0x2c] sm:$0xf] %vm464, %v443
    %477 = vst.msk [vmem:[%s3 + $0x30] sm:$0xf] %vm464, %v444
    %478 = vst.msk [vmem:[%s3 + $0x34] sm:$0xf] %vm464, %v445
    %479 = vst.msk [vmem:[%s3 + $0x38] sm:$0xf] %vm464, %v446
    %480 = vst.msk [vmem:[%s3 + $0x3c] sm:$0xf] %vm464, %v447
  $region21: #{discriminator_forward.2} parent=0 // pred_fallthru
    _
  // Predicated region
  $region22: #{discriminator_forward.2} parent=0 // pred_check
    _
  $region23: #{discriminator_forward.2} parent=0 // pred_check_branch
    %482 = sbr.rel (0) target = $region25
  $region24: #{discriminator_forward.2} parent=0 // pred_region
    _
  $region25: #{discriminator_forward.2} parent=0 // pred_fallthru
    _
  // Predicated region
  $region26: #{discriminator_forward.2} parent=0 // pred_check
    _
  $region27: #{discriminator_forward.2} parent=0 // pred_check_branch
    %484 = sbr.rel (0) target = $region29
  $region28: #{discriminator_forward.2} parent=0 // pred_region
    _
  $region29: #{discriminator_forward.2} parent=0 // pred_fallthru
    _

// kernel: discriminator_forward.3
$region0: #{discriminator_forward.3}
  #allocation0 [shape = 'u32[]', space=smem, size = 0x4, offset = 0x4, fixed_abs, tag = 'smem constant byte address 0x4 - core index']
  #allocation1 [shape = 'u32[144,128]{1,0:T(1,128)}', space=vmem, size = 0x12000, scoped, tag = 'internal scratch']
  #allocation2 [shape = 'f32[32,64]{1,0:T(8,128)}', space=vmem, size = 0x4000, scoped, tag = 'scratch operand']
  %s0 = inlined_call_operand.vmem [shape: bf16[32,384], index: 0, kind: input, shape index: {}]
  %s1 = inlined_call_operand.vmem [shape: bf16[384,64], index: 1, kind: input, shape index: {}]
  %s2 = inlined_call_operand.vmem [shape: f32[1,64], index: 2, kind: input, shape index: {}]
  %s3 = inlined_call_operand.vmem [shape: bf16[64,128], index: 3, kind: input, shape index: {}]
  %s4 = inlined_call_operand.vmem [shape: f32[1,128], index: 4, kind: input, shape index: {}]
  %s5 = inlined_call_operand.vmem [shape: f32[32,128], index: 5, kind: output, shape index: {0}]
  %s6 = inlined_call_operand.vmem [shape: f32[32,128], index: 6, kind: output, shape index: {1}]
  %7 = xla_tuple %s5, %s6
  %s8 = sld [smem:[#allocation0]]
  $region46: #{discriminator_forward.3} parent=0
    _
  %s10 = ssub.s32 1, %s8
  %s11 = scalar_select 0, %s10, %s8
  // Predicated region
  $region2: #{discriminator_forward.3} parent=0 // pred_check
    _
  $region3: #{discriminator_forward.3} parent=0 // pred_check_branch
    %13 = sbr.rel (0) target = $region5
  $region4: #{discriminator_forward.3} parent=0 // pred_region
    _
  $region5: #{discriminator_forward.3} parent=0 // pred_fallthru
    _
  // Predicated region
  $region6: #{discriminator_forward.3} parent=0 // pred_check
    _
  $region7: #{discriminator_forward.3} parent=0 // pred_check_branch
    %15 = sbr.rel (0) target = $region9
  $region8: #{discriminator_forward.3} parent=0 // pred_region
    _
  $region9: #{discriminator_forward.3} parent=0 // pred_fallthru
    _
  // Predicated region
  $region10: #{discriminator_forward.3} parent=0 // pred_check
    _
  $region11: #{discriminator_forward.3} parent=0 // pred_check_branch
    %17 = sbr.rel (0) target = $region13
  $region12: #{discriminator_forward.3} parent=0 // pred_region
    _
  $region13: #{discriminator_forward.3} parent=0 // pred_fallthru
    _
  // Predicated region
  $region14: #{discriminator_forward.3} parent=0 // pred_check
    _
  $region15: #{discriminator_forward.3} parent=0 // pred_check_branch
    %19 = sbr.rel (0) target = $region17
  $region16: #{discriminator_forward.3} parent=0 // pred_region
    _
  $region17: #{discriminator_forward.3} parent=0 // pred_fallthru
    _
  // Predicated region
  $region18: #{discriminator_forward.3} parent=0 // pred_check
    _
  $region19: #{discriminator_forward.3} parent=0 // pred_check_branch
    %21 = sbr.rel (0) target = $region21
  $region20: #{discriminator_forward.3} parent=0 // pred_region
    _
  $region21: #{discriminator_forward.3} parent=0 // pred_fallthru
    _
  %p23 = scmp.eq.s32.totalorder 0, 0
  // Predicated region
  $region22: #{discriminator_forward.3} parent=0 // pred_check
    %p24 = pneg %p23
  $region23: #{discriminator_forward.3} parent=0 // pred_check_branch
    %26 = sbr.rel (%p24) target = $region25
  $region24: #{discriminator_forward.3} parent=0 // pred_region
    %vm27 = vcmask 523264
    %28 = vst.msk [vmem:[#allocation2] sm:$0xff] %vm27, 0.0
    %29 = vst.msk [vmem:[#allocation2 + $0x8] sm:$0xff] %vm27, 0.0
    %30 = vst.msk [vmem:[#allocation2 + $0x10] sm:$0xff] %vm27, 0.0
    %31 = vst.msk [vmem:[#allocation2 + $0x18] sm:$0xff] %vm27, 0.0
  $region25: #{discriminator_forward.3} parent=0 // pred_fallthru
    _
  %v32 = vld [vmem:[#allocation2] sm:$0xff]
  %v33 = vld [vmem:[#allocation2 + $0x8] sm:$0xff]
  %v34 = vld [vmem:[#allocation2 + $0x10] sm:$0xff]
  %v35 = vld [vmem:[#allocation2 + $0x18] sm:$0xff]
  %v36 = vld [vmem:[%s0] sm:$0xff]
  %v37 = vld [vmem:[%s0 + $0x8] sm:$0xf]
  %v38 = vld [vmem:[%s0 + $0xc] sm:$0xff]
  %v39 = vld [vmem:[%s0 + $0x14] sm:$0xf]
  %v40 = vld [vmem:[%s0 + $0x18] sm:$0xff]
  %v41 = vld [vmem:[%s0 + $0x20] sm:$0xf]
  %v42 = vld [vmem:[%s0 + $0x24] sm:$0xff]
  %v43 = vld [vmem:[%s0 + $0x2c] sm:$0xf]
  %v44 = vld [vmem:[%s1] sm:$0xf]
  %v45 = vld [vmem:[%s1 + $0x4] sm:$0xf]
  %v46 = vld [vmem:[%s1 + $0x8] sm:$0xf]
  %v47 = vld [vmem:[%s1 + $0xc] sm:$0xf]
  %v48 = vld [vmem:[%s1 + $0x10] sm:$0xf]
  %v49 = vld [vmem:[%s1 + $0x14] sm:$0xf]
  %v50 = vld [vmem:[%s1 + $0x18] sm:$0xf]
  %v51 = vld [vmem:[%s1 + $0x1c] sm:$0xf]
  %v52 = vld [vmem:[%s1 + $0x20] sm:$0xf]
  %v53 = vld [vmem:[%s1 + $0x24] sm:$0xf]
  %v54 = vld [vmem:[%s1 + $0x28] sm:$0xf]
  %v55 = vld [vmem:[%s1 + $0x2c] sm:$0xf]
  %v56 = vld [vmem:[%s1 + $0x30] sm:$0xf]
  %v57 = vld [vmem:[%s1 + $0x34] sm:$0xf]
  %v58 = vld [vmem:[%s1 + $0x38] sm:$0xf]
  %v59 = vld [vmem:[%s1 + $0x3c] sm:$0xf]
  %v60 = vld [vmem:[%s1 + $0x40] sm:$0xf]
  %v61 = vld [vmem:[%s1 + $0x44] sm:$0xf]
  %v62 = vld [vmem:[%s1 + $0x48] sm:$0xf]
  %v63 = vld [vmem:[%s1 + $0x4c] sm:$0xf]
  %v64 = vld [vmem:[%s1 + $0x50] sm:$0xf]
  %v65 = vld [vmem:[%s1 + $0x54] sm:$0xf]
  %v66 = vld [vmem:[%s1 + $0x58] sm:$0xf]
  %v67 = vld [vmem:[%s1 + $0x5c] sm:$0xf]
  %v68 = vld [vmem:[%s1 + $0x60] sm:$0xf]
  %v69 = vld [vmem:[%s1 + $0x64] sm:$0xf]
  %v70 = vld [vmem:[%s1 + $0x68] sm:$0xf]
  %v71 = vld [vmem:[%s1 + $0x6c] sm:$0xf]
  %v72 = vld [vmem:[%s1 + $0x70] sm:$0xf]
  %v73 = vld [vmem:[%s1 + $0x74] sm:$0xf]
  %v74 = vld [vmem:[%s1 + $0x78] sm:$0xf]
  %v75 = vld [vmem:[%s1 + $0x7c] sm:$0xf]
  %v76 = vld [vmem:[%s1 + $0x80] sm:$0xf]
  %v77 = vld [vmem:[%s1 + $0x84] sm:$0xf]
  %v78 = vld [vmem:[%s1 + $0x88] sm:$0xf]
  %v79 = vld [vmem:[%s1 + $0x8c] sm:$0xf]
  %v80 = vld [vmem:[%s1 + $0x90] sm:$0xf]
  %v81 = vld [vmem:[%s1 + $0x94] sm:$0xf]
  %v82 = vld [vmem:[%s1 + $0x98] sm:$0xf]
  %v83 = vld [vmem:[%s1 + $0x9c] sm:$0xf]
  %v84 = vld [vmem:[%s1 + $0xa0] sm:$0xf]
  %v85 = vld [vmem:[%s1 + $0xa4] sm:$0xf]
  %v86 = vld [vmem:[%s1 + $0xa8] sm:$0xf]
  %v87 = vld [vmem:[%s1 + $0xac] sm:$0xf]
  %v88 = vld [vmem:[%s1 + $0xb0] sm:$0xf]
  %v89 = vld [vmem:[%s1 + $0xb4] sm:$0xf]
  %v90 = vld [vmem:[%s1 + $0xb8] sm:$0xf]
  %v91 = vld [vmem:[%s1 + $0xbc] sm:$0xf]
  %v100 = vunpack.c.l.b16 %v36
  %v101 = vunpack.c.h.b16 %v36
  %v102 = vunpack.c.l.b16 %v37
  %v103 = vunpack.c.l.b16 %v38
  %v104 = vunpack.c.h.b16 %v38
  %v105 = vunpack.c.l.b16 %v39
  %v106 = vunpack.c.l.b16 %v40
  %v107 = vunpack.c.h.b16 %v40
  %v108 = vunpack.c.l.b16 %v41
  %v109 = vunpack.c.l.b16 %v42
  %v110 = vunpack.c.h.b16 %v42
  %v111 = vunpack.c.l.b16 %v43
  %v112 = vpack.c.b16 %v103, %v100
  %v113 = vpack.c.b16 %v104, %v101
  %v114 = vpack.c.b16 %v105, %v102
  %v115 = vpack.c.b16 %v109, %v106
  %v116 = vpack.c.b16 %v110, %v107
  %v117 = vpack.c.b16 %v111, %v108
  %v172 = vunpack.c.l.b16 %v44
  %v173 = vunpack.c.l.b16 %v45
  %v174 = vunpack.c.l.b16 %v46
  %v175 = vunpack.c.l.b16 %v47
  %v176 = vunpack.c.l.b16 %v48
  %v177 = vunpack.c.l.b16 %v49
  %v178 = vunpack.c.l.b16 %v50
  %v179 = vunpack.c.l.b16 %v51
  %v180 = vunpack.c.l.b16 %v52
  %v181 = vunpack.c.l.b16 %v53
  %v182 = vunpack.c.l.b16 %v54
  %v183 = vunpack.c.l.b16 %v55
  %v184 = vunpack.c.l.b16 %v56
  %v185 = vunpack.c.l.b16 %v57
  %v186 = vunpack.c.l.b16 %v58
  %v187 = vunpack.c.l.b16 %v59
  %v188 = vunpack.c.l.b16 %v60
  %v189 = vunpack.c.l.b16 %v61
  %v190 = vunpack.c.l.b16 %v62
  %v191 = vunpack.c.l.b16 %v63
  %v192 = vunpack.c.l.b16 %v64
  %v193 = vunpack.c.l.b16 %v65
  %v194 = vunpack.c.l.b16 %v66
  %v195 = vunpack.c.l.b16 %v67
  %v196 = vunpack.c.l.b16 %v68
  %v197 = vunpack.c.l.b16 %v69
  %v198 = vunpack.c.l.b16 %v70
  %v199 = vunpack.c.l.b16 %v71
  %v200 = vunpack.c.l.b16 %v72
  %v201 = vunpack.c.l.b16 %v73
  %v202 = vunpack.c.l.b16 %v74
  %v203 = vunpack.c.l.b16 %v75
  %v204 = vunpack.c.l.b16 %v76
  %v205 = vunpack.c.l.b16 %v77
  %v206 = vunpack.c.l.b16 %v78
  %v207 = vunpack.c.l.b16 %v79
  %v208 = vunpack.c.l.b16 %v80
  %v209 = vunpack.c.l.b16 %v81
  %v210 = vunpack.c.l.b16 %v82
  %v211 = vunpack.c.l.b16 %v83
  %v212 = vunpack.c.l.b16 %v84
  %v213 = vunpack.c.l.b16 %v85
  %v214 = vunpack.c.l.b16 %v86
  %v215 = vunpack.c.l.b16 %v87
  %v216 = vunpack.c.l.b16 %v88
  %v217 = vunpack.c.l.b16 %v89
  %v218 = vunpack.c.l.b16 %v90
  %v219 = vunpack.c.l.b16 %v91
  %v220 = vpack.c.b16 %v173, %v172
  %v221 = vpack.c.b16 %v175, %v174
  %v222 = vpack.c.b16 %v177, %v176
  %v223 = vpack.c.b16 %v179, %v178
  %v224 = vpack.c.b16 %v181, %v180
  %v225 = vpack.c.b16 %v183, %v182
  %v226 = vpack.c.b16 %v185, %v184
  %v227 = vpack.c.b16 %v187, %v186
  %v228 = vpack.c.b16 %v189, %v188
  %v229 = vpack.c.b16 %v191, %v190
  %v230 = vpack.c.b16 %v193, %v192
  %v231 = vpack.c.b16 %v195, %v194
  %v232 = vpack.c.b16 %v197, %v196
  %v233 = vpack.c.b16 %v199, %v198
  %v234 = vpack.c.b16 %v201, %v200
  %v235 = vpack.c.b16 %v203, %v202
  %v236 = vpack.c.b16 %v205, %v204
  %v237 = vpack.c.b16 %v207, %v206
  %v238 = vpack.c.b16 %v209, %v208
  %v239 = vpack.c.b16 %v211, %v210
  %v240 = vpack.c.b16 %v213, %v212
  %v241 = vpack.c.b16 %v215, %v214
  %v242 = vpack.c.b16 %v217, %v216
  %v243 = vpack.c.b16 %v219, %v218
  %268 = vmatprep.subr.bf16.mxu0 0
  %269 = vmatpush1.bf16.msra.mxu0 %v220
  %270 = vmatprep.subr.bf16.mxu0 0
  %271 = vmatpush1.bf16.msra.mxu0 %v221
  %272 = vmatprep.subr.bf16.mxu0 0
  %273 = vmatpush1.bf16.msra.mxu0 %v222
  %274 = vmatprep.subr.bf16.mxu0 0
  %275 = vmatpush1.bf16.msra.mxu0 %v223
  %276 = vmatprep.subr.bf16.mxu0 0
  %277 = vmatpush1.bf16.msra.mxu0 %v224
  %278 = vmatprep.subr.bf16.mxu0 0
  %279 = vmatpush1.bf16.msra.mxu0 %v225
  %280 = vmatprep.subr.bf16.mxu0 0
  %281 = vmatpush1.bf16.msra.mxu0 %v226
  %282 = vmatprep.subr.bf16.mxu0 0
  %283 = vmatpush1.bf16.msra.mxu0 %v227
  %284 = vmatprep.subr.bf16.mxu0 0
  %285 = vmatpush1.bf16.msra.mxu0 %v228
  %286 = vmatprep.subr.bf16.mxu0 0
  %287 = vmatpush1.bf16.msra.mxu0 %v229
  %288 = vmatprep.subr.bf16.mxu0 0
  %289 = vmatpush1.bf16.msra.mxu0 %v230
  %290 = vmatprep.subr.bf16.mxu0 0
  %291 = vmatpush1.bf16.msra.mxu0 %v231
  %292 = vmatprep.subr.bf16.mxu0 0
  %293 = vmatpush1.bf16.msra.mxu0 %v232
  %294 = vmatprep.subr.bf16.mxu0 0
  %295 = vmatpush1.bf16.msra.mxu0 %v233
  %296 = vmatprep.subr.bf16.mxu0 0
  %297 = vmatpush1.bf16.msra.mxu0 %v234
  %298 = vmatprep.subr.bf16.mxu0 0
  %299 = vmatpush1.bf16.msra.mxu0 %v235
  %300 = vmatprep.mubr.bf16.mxu0 %v113
  %301 = vmatmul.mubr.bf16.gmra.mrb[0].mxu0 %v112
  %v302 = vpop.f32.mrb[0].mxu0
  %v303 = vadd.f32 0.0, %v302
  %v304 = vpop.f32.mrb[0].mxu0
  %v305 = vpop.f32.mrb[0].mxu0
  %v306 = vadd.f32 0.0, %v305
  %v307 = vpop.f32.mrb[0].mxu0
  %308 = vmatprep.mubr.bf16.mxu0 %v116
  %309 = vmatmul.mubr.bf16.gmra.mrb[0].mxu0 %v115
  %v310 = vpop.f32.mrb[0].mxu0
  %v311 = vadd.f32 0.0, %v310
  %v312 = vpop.f32.mrb[0].mxu0
  %v313 = vpop.f32.mrb[0].mxu0
  %v314 = vadd.f32 0.0, %v313
  %v315 = vpop.f32.mrb[0].mxu0
  %316 = vdwg.mxu0
  %317 = vmatprep.subr.bf16.mxu0 0
  %318 = vmatpush1.bf16.msra.mxu0 %v236
  %319 = vmatprep.subr.bf16.mxu0 0
  %320 = vmatpush1.bf16.msra.mxu0 %v237
  %321 = vmatprep.subr.bf16.mxu0 0
  %322 = vmatpush1.bf16.msra.mxu0 %v238
  %323 = vmatprep.subr.bf16.mxu0 0
  %324 = vmatpush1.bf16.msra.mxu0 %v239
  %325 = vmatprep.subr.bf16.mxu0 0
  %326 = vmatpush1.bf16.msra.mxu0 %v240
  %327 = vmatprep.subr.bf16.mxu0 0
  %328 = vmatpush1.bf16.msra.mxu0 %v241
  %329 = vmatprep.subr.bf16.mxu0 0
  %330 = vmatpush1.bf16.msra.mxu0 %v242
  %331 = vmatprep.subr.bf16.mxu0 0
  %332 = vmatpush1.bf16.msra.mxu0 %v243
  %333 = vmatprep.subr.bf16.mxu0 0
  %334 = vmatpush1.bf16.msra.mxu0 0
  %335 = vmatprep.subr.bf16.mxu0 0
  %336 = vmatpush1.bf16.msra.mxu0 0
  %337 = vmatprep.subr.bf16.mxu0 0
  %338 = vmatpush1.bf16.msra.mxu0 0
  %339 = vmatprep.subr.bf16.mxu0 0
  %340 = vmatpush1.bf16.msra.mxu0 0
  %341 = vmatprep.subr.bf16.mxu0 0
  %342 = vmatpush1.bf16.msra.mxu0 0
  %343 = vmatprep.subr.bf16.mxu0 0
  %344 = vmatpush1.bf16.msra.mxu0 0
  %345 = vmatprep.subr.bf16.mxu0 0
  %346 = vmatpush1.bf16.msra.mxu0 0
  %347 = vmatprep.subr.bf16.mxu0 0
  %348 = vmatpush1.bf16.msra.mxu0 0
  %349 = vmatprep.mubr.bf16.mxu0 0
  %350 = vmatmul.mubr.bf16.gmra.mrb[0].mxu0 %v114
  %v351 = vpop.f32.mrb[0].mxu0
  %v352 = vadd.f32 %v303, %v351
  %v353 = vpop.f32.mrb[0].mxu0
  %v354 = vpop.f32.mrb[0].mxu0
  %v355 = vadd.f32 %v306, %v354
  %v356 = vpop.f32.mrb[0].mxu0
  %357 = vmatprep.mubr.bf16.mxu0 0
  %358 = vmatmul.mubr.bf16.gmra.mrb[0].mxu0 %v117
  %v359 = vpop.f32.mrb[0].mxu0
  %v360 = vadd.f32 %v311, %v359
  %v361 = vpop.f32.mrb[0].mxu0
  %v362 = vpop.f32.mrb[0].mxu0
  %v363 = vadd.f32 %v314, %v362
  %v364 = vpop.f32.mrb[0].mxu0
  %365 = vdwg.mxu0
  %v366 = vadd.f32 %v32, %v352
  %v367 = vadd.f32 %v33, %v355
  %v368 = vadd.f32 %v34, %v360
  %v369 = vadd.f32 %v35, %v363
  %vm370 = vcmask 523264
  %371 = vst.msk [vmem:[#allocation2] sm:$0xff] %vm370, %v366
  %372 = vst.msk [vmem:[#allocation2 + $0x8] sm:$0xff] %vm370, %v367
  %373 = vst.msk [vmem:[#allocation2 + $0x10] sm:$0xff] %vm370, %v368
  %374 = vst.msk [vmem:[#allocation2 + $0x18] sm:$0xff] %vm370, %v369
  // Predicated region
  $region26: #{discriminator_forward.3} parent=0 // pred_check
    %p375 = pneg %p23
  $region27: #{discriminator_forward.3} parent=0 // pred_check_branch
    %377 = sbr.rel (%p375) target = $region29
  $region28: #{discriminator_forward.3} parent=0 // pred_region
    %v378 = vld [vmem:[#allocation2] sm:$0xff]
    %v379 = vld [vmem:[#allocation2 + $0x8] sm:$0xff]
    %v380 = vld [vmem:[#allocation2 + $0x10] sm:$0xff]
    %v381 = vld [vmem:[#allocation2 + $0x18] sm:$0xff]
    %v382 = vld [vmem:[%s2] sm:$0x1]
    %v384 = vlaneseq
    %v385 = vshrl.u32 %v384, 7
    %v386 = vsub.s32 0, %v385
    %v387 = vrot.slane %v382, %v386
    %v389 = vadd.f32 %v378, %v387
    %v390 = vadd.f32 %v379, %v387
    %v391 = vadd.f32 %v380, %v387
    %v392 = vadd.f32 %v381, %v387
    %vm393 = vcmp.ge.f32.partialorder %v389, 0.0
    %vm394 = vcmp.ge.f32.partialorder %v390, 0.0
    %vm395 = vcmp.ge.f32.partialorder %v391, 0.0
    %vm396 = vcmp.ge.f32.partialorder %v392, 0.0
    %v397 = vmul.f32 %v389, 0.2
    %v398 = vmul.f32 %v390, 0.2
    %v399 = vmul.f32 %v391, 0.2
    %v400 = vmul.f32 %v392, 0.2
    %v401 = vsel %vm393, %v389, %v397
    %v402 = vsel %vm394, %v390, %v398
    %v403 = vsel %vm395, %v391, %v399
    %v404 = vsel %vm396, %v392, %v400
    %v405 = vpack.c.bf16 %v402, %v401
    %v406 = vpack.c.bf16 %v404, %v403
    %v407 = vld [vmem:[%s3] sm:$0xf]
    %v408 = vld [vmem:[%s3 + $0x4] sm:$0xf]
    %v409 = vld [vmem:[%s3 + $0x8] sm:$0xf]
    %v410 = vld [vmem:[%s3 + $0xc] sm:$0xf]
    %v411 = vld [vmem:[%s3 + $0x10] sm:$0xf]
    %v412 = vld [vmem:[%s3 + $0x14] sm:$0xf]
    %v413 = vld [vmem:[%s3 + $0x18] sm:$0xf]
    %v414 = vld [vmem:[%s3 + $0x1c] sm:$0xf]
    %v415 = vld [vmem:[%s4] sm:$0x1]
    %v417 = vlaneseq
    %v418 = vshrl.u32 %v417, 7
    %v419 = vsub.s32 0, %v418
    %v420 = vrot.slane %v415, %v419
    %v430 = vunpack.c.l.b16 %v407
    %v431 = vunpack.c.l.b16 %v408
    %v432 = vunpack.c.l.b16 %v409
    %v433 = vunpack.c.l.b16 %v410
    %v434 = vunpack.c.l.b16 %v411
    %v435 = vunpack.c.l.b16 %v412
    %v436 = vunpack.c.l.b16 %v413
    %v437 = vunpack.c.l.b16 %v414
    %v438 = vpack.c.b16 %v431, %v430
    %v439 = vpack.c.b16 %v433, %v432
    %v440 = vpack.c.b16 %v435, %v434
    %v441 = vpack.c.b16 %v437, %v436
    %v447 = vsel %vm370, %v405, 0
    %v450 = vsel %vm370, %v406, 0
    %452 = vmatprep.subr.bf16.mxu0 0
    %453 = vmatpush1.bf16.msra.mxu0 %v438
    %454 = vmatprep.subr.bf16.mxu0 0
    %455 = vmatpush1.bf16.msra.mxu0 %v439
    %456 = vmatprep.subr.bf16.mxu0 0
    %457 = vmatpush1.bf16.msra.mxu0 %v440
    %458 = vmatprep.subr.bf16.mxu0 0
    %459 = vmatpush1.bf16.msra.mxu0 %v441
    %460 = vmatprep.subr.bf16.mxu0 0
    %461 = vmatpush1.bf16.msra.mxu0 0
    %462 = vmatprep.subr.bf16.mxu0 0
    %463 = vmatpush1.bf16.msra.mxu0 0
    %464 = vmatprep.subr.bf16.mxu0 0
    %465 = vmatpush1.bf16.msra.mxu0 0
    %466 = vmatprep.subr.bf16.mxu0 0
    %467 = vmatpush1.bf16.msra.mxu0 0
    %468 = vmatprep.subr.bf16.mxu0 0
    %469 = vmatpush1.bf16.msra.mxu0 0
    %470 = vmatprep.subr.bf16.mxu0 0
    %471 = vmatpush1.bf16.msra.mxu0 0
    %472 = vmatprep.subr.bf16.mxu0 0
    %473 = vmatpush1.bf16.msra.mxu0 0
    %474 = vmatprep.subr.bf16.mxu0 0
    %475 = vmatpush1.bf16.msra.mxu0 0
    %476 = vmatprep.subr.bf16.mxu0 0
    %477 = vmatpush1.bf16.msra.mxu0 0
    %478 = vmatprep.subr.bf16.mxu0 0
    %479 = vmatpush1.bf16.msra.mxu0 0
    %480 = vmatprep.subr.bf16.mxu0 0
    %481 = vmatpush1.bf16.msra.mxu0 0
    %482 = vmatprep.subr.bf16.mxu0 0
    %483 = vmatpush1.bf16.msra.mxu0 0
    %484 = vmatprep.mubr.bf16.mxu0 0
    %485 = vmatmul.mubr.bf16.gmra.mrb[0].mxu0 %v447
    %v486 = vpop.f32.mrb[0].mxu0
    %v487 = vadd.f32 %v420, %v486
    %v488 = vpop.f32.mrb[0].mxu0
    %v489 = vpop.f32.mrb[0].mxu0
    %v490 = vadd.f32 %v420, %v489
    %v491 = vpop.f32.mrb[0].mxu0
    %492 = vmatprep.mubr.bf16.mxu0 0
    %493 = vmatmul.mubr.bf16.gmra.mrb[0].mxu0 %v450
    %v494 = vpop.f32.mrb[0].mxu0
    %v495 = vadd.f32 %v420, %v494
    %v496 = vpop.f32.mrb[0].mxu0
    %v497 = vpop.f32.mrb[0].mxu0
    %v498 = vadd.f32 %v420, %v497
    %v499 = vpop.f32.mrb[0].mxu0
    %500 = vdwg.mxu0
    %501 = vst [vmem:[%s6] sm:$0xff] %v487
    %502 = vst [vmem:[%s6 + $0x8] sm:$0xff] %v490
    %503 = vst [vmem:[%s6 + $0x10] sm:$0xff] %v495
    %504 = vst [vmem:[%s6 + $0x18] sm:$0xff] %v498
    %v505 = vxor.u32 %v487, 2147483648
    %v506 = vxor.u32 %v490, 2147483648
    %v507 = vxor.u32 %v495, 2147483648
    %v508 = vxor.u32 %v498, 2147483648
    %v509 = vmul.f32 %v505, 1.442695
    %v510 = vpow.pop %v509
    %v511 = vmul.f32 %v506, 1.442695
    %v512 = vpow.pop %v511
    %v513 = vmul.f32 %v507, 1.442695
    %v514 = vpow.pop %v513
    %v515 = vmul.f32 %v508, 1.442695
    %v516 = vpow.pop %v515
    %v517 = vadd.f32 %v510, 1.0
    %v518 = vadd.f32 %v512, 1.0
    %v519 = vadd.f32 %v514, 1.0
    %v520 = vadd.f32 %v516, 1.0
    %v521 = vrcp.pop %v517
    %v522 = vmul.f32 1.0, %v521
    %v523 = vrcp.pop %v518
    %v524 = vmul.f32 1.0, %v523
    %v525 = vrcp.pop %v519
    %v526 = vmul.f32 1.0, %v525
    %v527 = vrcp.pop %v520
    %v528 = vmul.f32 1.0, %v527
    %529 = vst [vmem:[%s5] sm:$0xff] %v522
    %530 = vst [vmem:[%s5 + $0x8] sm:$0xff] %v524
    %531 = vst [vmem:[%s5 + $0x10] sm:$0xff] %v526
    %532 = vst [vmem:[%s5 + $0x18] sm:$0xff] %v528
  $region29: #{discriminator_forward.3} parent=0 // pred_fallthru
    _
  // Predicated region
  $region30: #{discriminator_forward.3} parent=0 // pred_check
    _
  $region31: #{discriminator_forward.3} parent=0 // pred_check_branch
    %534 = sbr.rel (0) target = $region33
  $region32: #{discriminator_forward.3} parent=0 // pred_region
    _
  $region33: #{discriminator_forward.3} parent=0 // pred_fallthru
    _
  // Predicated region
  $region34: #{discriminator_forward.3} parent=0 // pred_check
    _
  $region35: #{discriminator_forward.3} parent=0 // pred_check_branch
    %536 = sbr.rel (0) target = $region37
  $region36: #{discriminator_forward.3} parent=0 // pred_region
    _
  $region37: #{discriminator_forward.3} parent=0 // pred_fallthru
    _
  // Predicated region
  $region38: #{discriminator_forward.3} parent=0 // pred_check
    _
  $region39: #{discriminator_forward.3} parent=0 // pred_check_branch
    %538 = sbr.rel (0) target = $region41
  $region40: #{discriminator_forward.3} parent=0 // pred_region
    _
  $region41: #{discriminator_forward.3} parent=0 // pred_fallthru
    _
  // Predicated region
  $region42: #{discriminator_forward.3} parent=0 // pred_check
    _
  $region43: #{discriminator_forward.3} parent=0 // pred_check_branch
    %540 = sbr.rel (0) target = $region45
  $region44: #{discriminator_forward.3} parent=0 // pred_region
    _
  $region45: #{discriminator_forward.3} parent=0 // pred_fallthru
    _

</llo_original>
